<compile_context>
chip_gen: v5e
topology: v5e:2x2
jax: 0.10.0
libtpu: 0.0.40
codegen_flags: <defaults>
</compile_context>

<pallas_src>
import functools
import math

import jax
import jax.numpy as jnp
from jax import lax
from jax.experimental import pallas as pl
from jax.experimental.pallas import tpu as pltpu


def _mix32(k):
    """murmur3 fmix32 finalizer on uint32 arrays (full avalanche)."""
    k = k ^ (k >> 16)
    k = k * jnp.uint32(0x85EBCA6B)
    k = k ^ (k >> 13)
    k = k * jnp.uint32(0xC2B2AE35)
    k = k ^ (k >> 16)
    return k


def _pe_kernel(x_ref, p_ref, o_ref, *, seq_tile, seq_len, dropout_rate,
               training, seed):
    # x_ref / p_ref / o_ref: (1, TS, H) VMEM tiles.  Elementwise add in the
    # activation dtype (no f32 upcast -> half the vreg/VMEM traffic for bf16).
    y = x_ref[...] + p_ref[...]

    if training and dropout_rate > 0.0:
        # Inverted dropout (torch.nn.Dropout train-mode semantics).  The keep
        # mask is derived from a per-element global counter hashed with the
        # seed, so masks are independent across all grid tiles and the same
        # code lowers on TPU and in interpret mode.
        s = pl.program_id(0)                      # sequence-tile index (outer)
        b = pl.program_id(1)                      # batch index (inner)
        shape = y.shape                           # (1, TS, H)
        hidden = shape[-1]
        row = lax.broadcasted_iota(jnp.uint32, shape, 1)
        col = lax.broadcasted_iota(jnp.uint32, shape, 2)
        base = (b.astype(jnp.uint32) * jnp.uint32(seq_len)
                + s.astype(jnp.uint32) * jnp.uint32(seq_tile))
        gid = (base + row) * jnp.uint32(hidden) + col     # unique element id
        bits = _mix32(gid ^ jnp.uint32(seed & 0xFFFFFFFF))
        keep_prob = 1.0 - float(dropout_rate)
        thresh = jnp.uint32(min(int(round(keep_prob * 2.0 ** 32)), 2 ** 32 - 1))
        keep = bits < thresh
        scale = jnp.asarray(1.0 / keep_prob, dtype=y.dtype)
        y = jnp.where(keep, y * scale, jnp.zeros_like(y))

    o_ref[...] = y


def make_positional_table(max_len, num_hiddens, dtype=jnp.float32):
    """Deterministic parameter setup, identical to the torch __init__."""
    pos = jnp.arange(max_len, dtype=jnp.float32).reshape(-1, 1)
    div = jnp.power(
        10000.0, jnp.arange(0, num_hiddens, 2, dtype=jnp.float32) / num_hiddens
    )
    x = pos / div                                  # (max_len, num_hiddens//2)
    P = jnp.zeros((1, max_len, num_hiddens), dtype=jnp.float32)
    P = P.at[:, :, 0::2].set(jnp.sin(x))
    P = P.at[:, :, 1::2].set(jnp.cos(x))
    return P.astype(dtype)


def _choose_seq_tile(seq_len, num_hiddens, itemsize,
                     per_buffer_budget=4 * 1024 * 1024):
    """Largest multiple-of-8 divisor of seq_len whose (TS, H) tile stays under
    ~4 MiB.  With double-buffered x/P/out (~6 buffers) that keeps total
    resident VMEM <= ~24 MiB, safe even on v7x (64 MiB physical)."""
    ts_max = max(8, per_buffer_budget // (num_hiddens * itemsize))
    for ts in range(min(seq_len, ts_max), 7, -1):
        if seq_len % ts == 0 and ts % 8 == 0:
            return ts
    return None


def positional_encoding(x, P, *, dropout_rate=0.0, training=False, seed=0,
                        donate_x=False):
    """x: (B, S, H); P: (1, max_len, H).  Returns dropout(x + P[:, :S, :])."""
    B, S, H = x.shape
    assert P.shape[0] == 1 and P.shape[2] == H
    assert S <= P.shape[1], "sequence length exceeds positional table max_len"
    if P.dtype != x.dtype:
        P = P.astype(x.dtype)   # one-off cast; keep P in the activation dtype

    # Lane density: if H is not a multiple of 128, fold `k` sequence rows into
    # the hidden axis so the kernel's last dim is >=128-aligned (unmasked
    # vector stores).  The x reshape is a free contiguous reshape; only P
    # needs one small slice+reshape in that (small-H) case.
    fold = 1
    if H % 128 != 0:
        k = ((128 * H) // math.gcd(128, H)) // H
        if S % k == 0:
            fold = k
    if fold > 1:
        S2, H2 = S // fold, H * fold
        x2 = x.reshape(B, S2, H2)
        p2 = P[:, :S, :].reshape(1, S2, H2)
        full_table = False
    else:
        S2, H2 = S, H
        x2, p2 = x, P
        full_table = True

    ts = _choose_seq_tile(S2, H2, x.dtype.itemsize)
    if ts is None:
        # Irregular S: single full-sequence tile (block == full dims).
        ts = S2
        if full_table:
            p2 = P[:, :S, :]
        p_index_map = lambda s, b: (0, 0, 0)
    else:
        # Index the positional table directly -- no extra HBM slice copy.
        p_index_map = lambda s, b: (0, s, 0)
    num_s_tiles = S2 // ts

    kernel = functools.partial(
        _pe_kernel, seq_tile=ts, seq_len=S2,
        dropout_rate=float(dropout_rate), training=bool(training),
        seed=int(seed))

    # Grid: (seq-tiles, batch).  Seq-tile axis outermost + "parallel" so v7x
    # megacore shards it across both TensorCores; batch innermost +
    # "arbitrary" so P's block index is constant between consecutive steps
    # (Pallas skips its re-DMA).
    out = pl.pallas_call(
        kernel,
        out_shape=jax.ShapeDtypeStruct((B, S2, H2), x.dtype),
        grid=(num_s_tiles, B),
        in_specs=[
            pl.BlockSpec((1, ts, H2), lambda s, b: (b, s, 0)),   # x tile
            pl.BlockSpec((1, ts, H2), p_index_map),              # P tile
        ],
        out_specs=pl.BlockSpec((1, ts, H2), lambda s, b: (b, s, 0)),
        compiler_params=pltpu.CompilerParams(
            dimension_semantics=("parallel", "arbitrary"),
            vmem_limit_bytes=48 * 1024 * 1024,
        ),
        input_output_aliases={0: 0} if donate_x else {},
    )(x2, p2)

    return out.reshape(B, S, H)


if __name__ == "__main__":
    # Small shapes consistent with the module's forward: (batch, seq, hidden).
    B, S, H = 2, 8, 32
    max_len, dropout = 1000, 0.1

    key = jax.random.PRNGKey(0)
    x = jax.random.normal(key, (B, S, H), dtype=jnp.float32)
    P = make_positional_table(max_len, H, dtype=jnp.float32)

    # Eval-mode forward (dropout is the identity): exact-match check.
    out = positional_encoding(x, P, dropout_rate=dropout, training=False)
    out = jax.block_until_ready(out)
    ref = x + P[:, :S, :]
    assert out.shape == (B, S, H) and out.dtype == x.dtype
    assert jnp.allclose(out, ref, atol=1e-6, rtol=1e-6)

    # Training-mode forward: distributionally-equivalent inverted dropout.
    # TODO(synk): dropout uses a stateless hash RNG, so it matches torch only
    # in distribution, not bit-for-bit.
    out_tr = jax.block_until_ready(
        positional_encoding(x, P, dropout_rate=dropout, training=True, seed=42)
    )
    assert out_tr.shape == (B, S, H) and out_tr.dtype == x.dtype

    print("KERNEL_OK")
</pallas_src>

<mosaic_0001>
module attributes {stable_mosaic.version = 11 : i64} {
  func.func @_pe_kernel(%arg0: i32, %arg1: i32, %arg2: memref<1x2x128xf32, #tpu.memory_space<vmem>>, %arg3: memref<1x2x128xf32, #tpu.memory_space<vmem>>, %arg4: memref<1x2x128xf32, #tpu.memory_space<vmem>>) attributes {dimension_semantics = [#tpu.dimension_semantics<parallel>, #tpu.dimension_semantics<arbitrary>], iteration_bounds = array<i64: 1, 2>, scalar_prefetch = 0 : i64, scratch_operands = 0 : i64, tpu.core_type = #tpu.core_type<tc>, window_params = [{transform_indices = @transform_0, window_bounds = array<i64: 1, 2, 128>}, {pipeline_mode = #tpu.pipeline_mode<synchronous>, transform_indices = @transform_1, window_bounds = array<i64: 1, 2, 128>}, {transform_indices = @transform_2, window_bounds = array<i64: 1, 2, 128>}]} {
    %c0 = arith.constant 0 : index
    %c0_0 = arith.constant 0 : index
    %c0_1 = arith.constant 0 : index
    %0 = vector.load %arg2[%c0, %c0_0, %c0_1] : memref<1x2x128xf32, #tpu.memory_space<vmem>>, vector<1x2x128xf32>
    %c0_2 = arith.constant 0 : index
    %c0_3 = arith.constant 0 : index
    %c0_4 = arith.constant 0 : index
    %1 = vector.load %arg3[%c0_2, %c0_3, %c0_4] : memref<1x2x128xf32, #tpu.memory_space<vmem>>, vector<1x2x128xf32>
    %2 = arith.addf %0, %1 : vector<1x2x128xf32>
    %c0_5 = arith.constant 0 : index
    %c0_6 = arith.constant 0 : index
    %c0_7 = arith.constant 0 : index
    %3 = vector.load %arg4[%c0_5, %c0_6, %c0_7] : memref<1x2x128xf32, #tpu.memory_space<vmem>>, vector<1x2x128xf32>
    tpu.vector_store %arg4[%c0_5, %c0_6, %c0_7], %2 {strides = array<i32>} : memref<1x2x128xf32, #tpu.memory_space<vmem>>, vector<1x2x128xf32>,
    return
  }
  func.func @transform_0(%arg0: i32, %arg1: i32) -> (i32, i32, i32) {
    %c0_i32 = arith.constant 0 : i32
    %c0_i32_0 = arith.constant 0 : i32
    return %arg1, %arg0, %c0_i32 : i32, i32, i32
  }
  func.func @transform_1(%arg0: i32, %arg1: i32) -> (i32, i32, i32) {
    %c0_i32 = arith.constant 0 : i32
    %c0_i32_0 = arith.constant 0 : i32
    %c0_i32_1 = arith.constant 0 : i32
    %c0_i32_2 = arith.constant 0 : i32
    return %c0_i32, %c0_i32_0, %c0_i32_1 : i32, i32, i32
  }
  func.func @transform_2(%arg0: i32, %arg1: i32) -> (i32, i32, i32) {
    %c0_i32 = arith.constant 0 : i32
    %c0_i32_0 = arith.constant 0 : i32
    return %arg1, %arg0, %c0_i32 : i32, i32, i32
  }
}

</mosaic_0001>

<llo_original>
// kernel: tpu_custom_call.1
$region0: #{tpu_custom_call.1}
  #allocation0 [shape = 'u32[]', space=smem, size = 0x4, offset = 0x4, fixed_abs, tag = 'smem constant byte address 0x4 - core index']
  #allocation1 [shape = 'u32[72,128]{1,0:T(1,128)}', space=vmem, size = 0x9000, scoped, tag = 'internal scratch']
  %s0 = inlined_call_operand.hbm [shape: f32[2,2,128], index: 0, kind: input, shape index: {}]
  %s1 = inlined_call_operand.hbm [shape: f32[1,2,128], index: 1, kind: input, shape index: {}]
  %s2 = inlined_call_operand.hbm [shape: f32[2,2,128], index: 2, kind: output, shape index: {}]
  %s3 = sld [smem:[#allocation0]]
  $region49: #{tpu_custom_call.1} parent=0
    _
  %s5 = ssub.s32 1, %s3
  %s6 = scalar_select 0, %s5, %s3
  $region1: #{tpu_custom_call.1} parent=0
    #allocation2 [shape = 'u8[2048]{0}', space=vmem, size = 0x800, scoped, tag = 'input window, operand 0']
    #allocation3 [shape = 's32[2]{0}', space=sflag, size = 0x8, scoped, tag = 'scoped memory for tpu_custom_call.1']
    #allocation4 [shape = 's32[2]{0}', space=sflag, size = 0x8, scoped, tag = 'scoped memory for tpu_custom_call.1']
    #allocation5 [shape = 'u8[1024]{0}', space=vmem, size = 0x400, scoped, tag = 'input window, operand 1, single buffered']
    #allocation6 [shape = 's32[1]{0}', space=sflag, size = 0x4, scoped, tag = 'scoped memory for tpu_custom_call.1']
    #allocation7 [shape = 'u8[2048]{0}', space=vmem, size = 0x800, scoped, tag = 'output window, operand 0']
    %7 = vsyncpa [#allocation3], 0
    %s8 = scalar_lea.sflag [#allocation3], 1
    %9 = vsyncpa %s8, 0
    %10 = vsyncpa [#allocation6], 0
    %11 = vsyncpa [#allocation4], 0
    %s12 = scalar_lea.sflag [#allocation4], 1
    %13 = vsyncpa %s12, 0
    loop: start=0, step=1, limit=4
    $region2: #{tpu_custom_call.1} parent=1 // loop_pre_header
      _
    $region3: #{tpu_custom_call.1} parent=1 // loop_header
      %s15 = sphi 0, %s19
      %p16 = scmp.ge.s32.totalorder %s15, 4
      %s22 = sphi 0, %s34
      %s23 = sphi 0, %s30
      %s24 = sphi 0, %s22
      %s25 = sphi 0, %s23
      %s26 = sphi 0, %s24
      %s27 = sphi 0, %s25
      %s39 = sphi 0, %s41
      %s42 = sphi 0, %s39
      %s43 = sphi 0, %s42
      %s59 = sphi 0, %s43
      %s63 = sphi 0, %s63
      %s65 = sphi 0, %s63
      %s66 = sphi 0, %s65
      %s80 = sphi 0, %s66
      %s88 = sphi 0, %s90
      %s91 = sphi 0, %s88
      %s92 = sphi 0, %s91
      %s108 = sphi 0, %s92
    $region4: #{tpu_custom_call.1} parent=1 // loop_header_branch
      %18 = sbr.rel (%p16) target = $region8
    $region5: #{tpu_custom_call.1} parent=1 // loop_body
      %s20 = ssub.s32 %s15, 1
      %s21 = ssub.s32 %s15, 2
      %s28 = sadd.s32 1, %s23
      %p29 = scmp.ge.s32.totalorder %s28, 2
      %s30 = scalar_select %p29, 0, %s28
      %s31 = sadd.s32 1, %s22
      %s32 = scalar_select %p29, %s31, %s22
      %p33 = scmp.ge.s32.totalorder %s32, 1
      %s34 = scalar_select %p33, 0, %s32
      %s35 = ssub.s32 %s23, %s30
      %s36 = ssub.s32 %s22, %s34
      %s37 = sor.u32 %s35, %s36
      %p38 = scmp.eq.s32.totalorder %s37, 0
      %s40 = sadd.s32 %s39, 1
      %s41 = scalar_select %p38, %s39, %s40
      %p44 = pneg %p38
      %p45 = scmp.eq.s32.totalorder %s15, 1
      %p46 = por %p44, %p45
      %p47 = scmp.ne.s32.totalorder %s39, %s42
      %p48 = scmp.eq.s32.totalorder %s15, 0
      %p49 = por %p47, %p48
      %p50 = scmp.ne.s32.totalorder %s39, %s42
      %p51 = scmp.eq.s32.totalorder %s20, 1
      %p52 = por %p50, %p51
      %p53 = scmp.ne.s32.totalorder %s42, %s43
      %p54 = scmp.eq.s32.totalorder %s20, 0
      %p55 = por %p53, %p54
      %p56 = scmp.ne.s32.totalorder %s42, %s43
      %p57 = scmp.eq.s32.totalorder %s21, 1
      %p58 = por %p56, %p57
      %p60 = scmp.ne.s32.totalorder %s43, %s59
      %p61 = scmp.eq.s32.totalorder %s21, 0
      %p62 = por %p60, %p61
      %s64 = sadd.s32 %s63, 1
      %p67 = scmp.eq.s32.totalorder %s15, 1
      %p68 = scmp.ne.s32.totalorder %s63, %s65
      %p69 = scmp.eq.s32.totalorder %s15, 0
      %p70 = por %p68, %p69
      %p71 = scmp.ne.s32.totalorder %s63, %s65
      %p72 = scmp.eq.s32.totalorder %s20, 1
      %p73 = por %p71, %p72
      %p74 = scmp.ne.s32.totalorder %s65, %s66
      %p75 = scmp.eq.s32.totalorder %s20, 0
      %p76 = por %p74, %p75
      %p77 = scmp.ne.s32.totalorder %s65, %s66
      %p78 = scmp.eq.s32.totalorder %s21, 1
      %p79 = por %p77, %p78
      %p81 = scmp.ne.s32.totalorder %s66, %s80
      %p82 = scmp.eq.s32.totalorder %s21, 0
      %p83 = por %p81, %p82
      %s84 = ssub.s32 %s23, %s30
      %s85 = ssub.s32 %s22, %s34
      %s86 = sor.u32 %s84, %s85
      %p87 = scmp.eq.s32.totalorder %s86, 0
      %s89 = sadd.s32 %s88, 1
      %s90 = scalar_select %p87, %s88, %s89
      %p93 = pneg %p87
      %p94 = scmp.eq.s32.totalorder %s15, 1
      %p95 = por %p93, %p94
      %p96 = scmp.ne.s32.totalorder %s88, %s91
      %p97 = scmp.eq.s32.totalorder %s15, 0
      %p98 = por %p96, %p97
      %p99 = scmp.ne.s32.totalorder %s88, %s91
      %p100 = scmp.eq.s32.totalorder %s20, 1
      %p101 = por %p99, %p100
      %p102 = scmp.ne.s32.totalorder %s91, %s92
      %p103 = scmp.eq.s32.totalorder %s20, 0
      %p104 = por %p102, %p103
      %p105 = scmp.ne.s32.totalorder %s91, %s92
      %p106 = scmp.eq.s32.totalorder %s21, 1
      %p107 = por %p105, %p106
      %p109 = scmp.ne.s32.totalorder %s92, %s108
      %p110 = scmp.eq.s32.totalorder %s21, 0
      %p111 = por %p109, %p110
      %p112 = scmp.le.s32.totalorder 1, %s15
      %p113 = scmp.lt.s32.totalorder %s15, 3
      %p114 = pnand %p112, %p113
      %p115 = pneg %p114
      // Predicated region
      $region9: #{tpu_custom_call.1} parent=5 // pred_check
        _
      $region10: #{tpu_custom_call.1} parent=5 // pred_check_branch
        %117 = sbr.rel (%p114) target = $region12
      $region11: #{tpu_custom_call.1} parent=5 // pred_region
        %s118 = ssub.s32 %s15, 1
        // Predicated region
        $region13: #{tpu_custom_call.1} parent=11 // pred_check
          %p119 = pneg %p76
        $region14: #{tpu_custom_call.1} parent=11 // pred_check_branch
          %121 = sbr.rel (%p119) target = $region16
        $region15: #{tpu_custom_call.1} parent=11 // pred_region
          %123 = vsyncadd [#allocation6], 0
          %s125 = sshll.u32 %s1, 4
          %s126 = int_to_ptr.hbm [resolvable:$true] %s125
          %s127 = sshll.u32 [#allocation5], 4
          %s128 = int_to_ptr.vmem [resolvable:$true] %s127
          %130 = dma.hbm_to_vmem [thread:$0]  %s126, 32, %s128, [#allocation6]
        $region16: #{tpu_custom_call.1} parent=11 // pred_fallthru
          _
      $region12: #{tpu_custom_call.1} parent=5 // pred_fallthru
        _
      %p131 = scmp.lt.s32.totalorder %s15, 2
      // Predicated region
      $region17: #{tpu_custom_call.1} parent=5 // pred_check
        %p132 = pneg %p131
      $region18: #{tpu_custom_call.1} parent=5 // pred_check_branch
        %134 = sbr.rel (%p132) target = $region20
      $region19: #{tpu_custom_call.1} parent=5 // pred_region
        // Predicated region
        $region21: #{tpu_custom_call.1} parent=19 // pred_check
          %p135 = pneg %p49
        $region22: #{tpu_custom_call.1} parent=19 // pred_check_branch
          %137 = sbr.rel (%p135) target = $region24
        $region23: #{tpu_custom_call.1} parent=19 // pred_region
          %s138 = sand.u32 %s39, 1
          %s139 = scalar_lea.sflag [#allocation3], %s138
          %s140 = sand.u32 %s39, 1
          %s141 = smul.addr %s140, 2
          %s142 = scalar_lea.vmem [#allocation2], %s141
          %144 = vsyncadd %s139, 0
          %s145 = sadd.s32 %s22, %s23
          %s146 = smul.addr %s145, 2
          %s147 = scalar_lea.hbm %s0, %s146
          %s149 = sshll.u32 %s147, 4
          %s150 = int_to_ptr.hbm [resolvable:$true] %s149
          %s151 = sshll.u32 %s142, 4
          %s152 = int_to_ptr.vmem [resolvable:$true] %s151
          %154 = dma.hbm_to_vmem [thread:$0]  %s150, 32, %s152, %s139
        $region24: #{tpu_custom_call.1} parent=19 // pred_fallthru
          _
      $region20: #{tpu_custom_call.1} parent=5 // pred_fallthru
        _
      %p155 = scmp.le.s32.totalorder 1, %s15
      %p156 = scmp.lt.s32.totalorder %s15, 3
      %p157 = pnand %p155, %p156
      %p158 = pneg %p157
      // Predicated region
      $region25: #{tpu_custom_call.1} parent=5 // pred_check
        _
      $region26: #{tpu_custom_call.1} parent=5 // pred_check_branch
        %160 = sbr.rel (%p157) target = $region28
      $region27: #{tpu_custom_call.1} parent=5 // pred_region
        %s161 = ssub.s32 %s15, 1
        %s162 = sand.u32 %s42, 1
        %s163 = scalar_lea.sflag [#allocation3], %s162
        %s164 = sand.u32 %s42, 1
        %s165 = smul.addr %s164, 2
        %s166 = scalar_lea.vmem [#allocation2], %s165
        // Predicated region
        $region29: #{tpu_custom_call.1} parent=27 // pred_check
          %p167 = pneg %p55
        $region30: #{tpu_custom_call.1} parent=27 // pred_check_branch
          %169 = sbr.rel (%p167) target = $region32
        $region31: #{tpu_custom_call.1} parent=27 // pred_region
          %171 = dma.done %s163, 32
        $region32: #{tpu_custom_call.1} parent=27 // pred_fallthru
          _
        // Predicated region
        $region33: #{tpu_custom_call.1} parent=27 // pred_check
          %p172 = pneg %p76
        $region34: #{tpu_custom_call.1} parent=27 // pred_check_branch
          %174 = sbr.rel (%p172) target = $region36
        $region35: #{tpu_custom_call.1} parent=27 // pred_region
          %176 = dma.done [#allocation6], 32
        $region36: #{tpu_custom_call.1} parent=27 // pred_fallthru
          _
        %s177 = sand.u32 %s42, 1
        %s178 = scalar_lea.sflag [#allocation3], %s177
        %s179 = sand.u32 %s42, 1
        %s180 = smul.addr %s179, 2
        %s181 = scalar_lea.vmem [#allocation2], %s180
        %p182 = pneg %p55
        %p183 = pneg %p52
        %p184 = pneg %p76
        %p185 = pneg %p73
        %p186 = pneg %p104
        %p187 = pneg %p101
        %s188 = sand.u32 %s91, 1
        %s189 = scalar_lea.sflag [#allocation4], %s188
        %s190 = sand.u32 %s91, 1
        %s191 = smul.addr %s190, 2
        %s192 = scalar_lea.vmem [#allocation7], %s191
        %v193 = vld [vmem:[%s166] sm:$0x3]
        %v194 = vld [vmem:[#allocation5] sm:$0x3]
        %v195 = vadd.f32 %v193, %v194
        %196 = vst [vmem:[%s192] sm:$0x3] %v195
        %s197 = sand.u32 %s91, 1
        %s198 = scalar_lea.sflag [#allocation4], %s197
        %s199 = sand.u32 %s91, 1
        %s200 = smul.addr %s199, 2
        %s201 = scalar_lea.vmem [#allocation7], %s200
        // Predicated region
        $region37: #{tpu_custom_call.1} parent=27 // pred_check
          %p202 = pneg %p101
        $region38: #{tpu_custom_call.1} parent=27 // pred_check_branch
          %204 = sbr.rel (%p202) target = $region40
        $region39: #{tpu_custom_call.1} parent=27 // pred_region
          %206 = vsyncadd %s198, 0
          %s207 = sadd.s32 %s24, %s25
          %s208 = smul.addr %s207, 2
          %s209 = scalar_lea.hbm %s2, %s208
          %s211 = sshll.u32 %s201, 4
          %s212 = int_to_ptr.vmem [resolvable:$true] %s211
          %s213 = sshll.u32 %s209, 4
          %s214 = int_to_ptr.hbm [resolvable:$true] %s213
          %216 = dma.vmem_to_hbm [thread:$0]  %s212, 32, %s214, %s198
        $region40: #{tpu_custom_call.1} parent=27 // pred_fallthru
          _
      $region28: #{tpu_custom_call.1} parent=5 // pred_fallthru
        _
      %p217 = scmp.le.s32.totalorder 2, %s15
      // Predicated region
      $region41: #{tpu_custom_call.1} parent=5 // pred_check
        %p218 = pneg %p217
      $region42: #{tpu_custom_call.1} parent=5 // pred_check_branch
        %220 = sbr.rel (%p218) target = $region44
      $region43: #{tpu_custom_call.1} parent=5 // pred_region
        %s221 = ssub.s32 %s15, 2
        // Predicated region
        $region45: #{tpu_custom_call.1} parent=43 // pred_check
          %p222 = pneg %p107
        $region46: #{tpu_custom_call.1} parent=43 // pred_check_branch
          %224 = sbr.rel (%p222) target = $region48
        $region47: #{tpu_custom_call.1} parent=43 // pred_region
          %s225 = sand.u32 %s92, 1
          %s226 = scalar_lea.sflag [#allocation4], %s225
          %s227 = sand.u32 %s92, 1
          %s228 = smul.addr %s227, 2
          %s229 = scalar_lea.vmem [#allocation7], %s228
          %231 = dma.done %s226, 32
        $region48: #{tpu_custom_call.1} parent=43 // pred_fallthru
          _
      $region44: #{tpu_custom_call.1} parent=5 // pred_fallthru
        _
    $region6: #{tpu_custom_call.1} parent=1 // loop_footer
      %s19 = sadd.s32 1, %s15
    $region7: #{tpu_custom_call.1} parent=1 // loop_footer_branch
      %14 = sbr.rel target = $region3
    $region8: #{tpu_custom_call.1} parent=1 // loop_exit
      _
    %232 = vsyncpa [#allocation3], 1
    %s233 = scalar_lea.sflag [#allocation3], 1
    %234 = vsyncpa %s233, 1
    %235 = vsyncpa [#allocation6], 1
    %236 = vsyncpa [#allocation4], 1
    %s237 = scalar_lea.sflag [#allocation4], 1
    %238 = vsyncpa %s237, 1

</llo_original>
